<compile_context>
chip_gen: v6e
topology: v6e:2x2x1
jax: 0.10.0
libtpu: 0.0.40
codegen_flags: <defaults>
</compile_context>

<pallas_src>
import functools
import math

import jax
import jax.numpy as jnp
from jax.experimental import pallas as pl
from jax.experimental.pallas import tpu as pltpu


def _attend(q, k, v, mask_row, scale):
    """softmax(scale * q @ k^T + mask) @ v for a head-batched slab.

    q:        (Ht, R, D)  stream dtype (f32 / bf16)
    k, v:     (Ht, C, D)  stream dtype
    mask_row: (1, C)      f32 additive mask along the key axis
    returns:  (Ht, R, D)  float32
    """
    s = jnp.einsum('hrd,hcd->hrc', q, k, preferred_element_type=jnp.float32)
    s = s * scale + mask_row                  # f32 score math, broadcasts rows
    s = s - jnp.max(s, axis=-1, keepdims=True)
    p = jnp.exp(s)
    denom = jnp.sum(p, axis=-1, keepdims=True)
    ctx = jnp.einsum('hrc,hcd->hrd', p.astype(v.dtype), v,
                     preferred_element_type=jnp.float32)
    return ctx * pl.reciprocal(denom, approx=False)


def _block_attn_kernel(q_ref, k_ref, v_ref, m_ref, o_ref, *, scale):
    # Blocks: q/k/v/o = (Ht, C, D); m = (1, C).
    ctx = _attend(q_ref[...], k_ref[...], v_ref[...], m_ref[...], scale)
    # TODO(synk): attention-prob dropout omitted (eval mode -> identity).
    o_ref[...] = ctx.astype(o_ref.dtype)


def _block_attn_overlap_kernel(q_ref,
                               k0_ref, k1_ref, k2_ref, k3_ref,
                               v0_ref, v1_ref, v2_ref, v3_ref,
                               m0_ref, m1_ref, m2_ref, m3_ref,
                               o_ref, *, scale, w):
    # Blocks: q/o = (Ht, C, D); each k*/v* = (Ht, w, D) half-chunk window
    # (half-chunks 2c-1, 2c, 2c+1, 2c+2, clamped at the sequence edges);
    # each m* = (1, w) additive mask half-chunk.
    q = q_ref[...]
    k0, k1, k2, k3 = k0_ref[...], k1_ref[...], k2_ref[...], k3_ref[...]
    v0, v1, v2, v3 = v0_ref[...], v1_ref[...], v2_ref[...], v3_ref[...]
    m0, m1, m2, m3 = m0_ref[...], m1_ref[...], m2_ref[...], m3_ref[...]

    # Main (non-shifted) pass: this chunk's keys are the two middle
    # half-chunks — no separate "main" K/V/mask streams are fetched from HBM.
    ctx_main = _attend(q,
                       jnp.concatenate([k1, k2], axis=1),
                       jnp.concatenate([v1, v2], axis=1),
                       jnp.concatenate([m1, m2], axis=1), scale)   # (Ht, C, D)

    # Shifted (half-chunk offset) pass: first half of the output chunk attends
    # the "left" window, second half attends the "right" window.
    ctx_lo = _attend(q[:, :w],
                     jnp.concatenate([k0, k1], axis=1),
                     jnp.concatenate([v0, v1], axis=1),
                     jnp.concatenate([m0, m1], axis=1), scale)     # (Ht, w, D)
    ctx_hi = _attend(q[:, w:],
                     jnp.concatenate([k2, k3], axis=1),
                     jnp.concatenate([v2, v3], axis=1),
                     jnp.concatenate([m2, m3], axis=1), scale)     # (Ht, w, D)

    # Blend 0.5*main + 0.5*shifted, except the first half of the first chunk
    # ("bot") and the second half of the last chunk ("top"), which are
    # main-only — matching torch.cat([bot, 0.5*mid + 0.5*shifted, top]).
    # Edge windows were fetched with clamped (finite, real) data, so the
    # weight-0 contribution is exact — no NaN/Inf risk.
    c = pl.program_id(1)
    nc = pl.num_programs(1)
    w_lo = jnp.where(c == 0, 0.0, 0.5)
    w_hi = jnp.where(c == nc - 1, 0.0, 0.5)
    out_lo = (1.0 - w_lo) * ctx_main[:, :w] + w_lo * ctx_lo
    out_hi = (1.0 - w_hi) * ctx_main[:, w:] + w_hi * ctx_hi
    # TODO(synk): attention-prob dropout omitted (eval mode -> identity).
    o_ref[...] = jnp.concatenate([out_lo, out_hi], axis=1).astype(o_ref.dtype)


def _vmem_capacity_bytes():
    try:
        return int(pltpu.get_tpu_info().vmem_capacity_bytes)
    except Exception:
        return 64 << 20          # conservative default (v7x per-TensorCore VMEM)


def _workset_bytes(ht, C, D, itemsize, overlap):
    # Streamed blocks per grid step (double-buffered by the pipeline) plus a
    # rough allowance for in-kernel f32 temporaries (scores/exp/contexts) and
    # the K/V window concatenation copies in the overlap path.
    io = (6 if overlap else 4) * ht * C * D * itemsize
    tmp = ht * C * (2 * C + 8 * D) * 4
    if overlap:
        tmp += 6 * ht * C * D * itemsize
    return 2 * io + tmp


def block_local_attention(q, k, v, mask, chunk_size, overlap=False,
                          head_tile=None, vmem_limit_bytes=None):
    """Equivalent of BlockLocalAttentionProduct.forward (eval mode).

    q, k, v: [B, H, T, D] (float32 or bfloat16 streams); mask: additive,
    [B, 1, 1, T] (float-valued, e.g. 0 / -1e4).  For bfloat16 streams,
    chunk_size must be a multiple of 16 (bf16 sublane tiling).
    """
    B, H, T, D = q.shape
    C = int(chunk_size)
    assert T % C == 0
    nc = T // C
    itemsize = jnp.dtype(q.dtype).itemsize
    sublane = {4: 8, 2: 16, 1: 32}.get(itemsize, 8)
    assert C % sublane == 0 or nc == 1, (
        f"chunk_size={C} must be a multiple of {sublane} for dtype {q.dtype}")

    cap = _vmem_capacity_bytes()
    if head_tile is None:
        ht = 1
        for cand in range(H, 0, -1):
            if H % cand == 0 and _workset_bytes(cand, C, D, itemsize,
                                                overlap) <= cap // 2:
                ht = cand
                break
    else:
        ht = int(head_tile)
    assert H % ht == 0
    nh = H // ht

    if vmem_limit_bytes is None:
        ws = _workset_bytes(ht, C, D, itemsize, overlap)
        if ws > (28 << 20):       # exceeds the default scoped VMEM limit
            vmem_limit_bytes = int(min(cap * 3 // 4, ws + (8 << 20)))

    scale = 1.0 / math.sqrt(D)
    grid = (B, nc, nh)            # heads innermost: mask blocks stay resident
    dimsem = ("parallel", "parallel", "parallel")
    out_shape = jax.ShapeDtypeStruct((B, H, T, D), q.dtype)
    qkv_spec = pl.BlockSpec((None, ht, C, D), lambda b, c, h: (b, h, c, 0))
    cparams = pltpu.CompilerParams(dimension_semantics=dimsem,
                                   vmem_limit_bytes=vmem_limit_bytes)

    if not overlap:
        mask_c = mask.astype(jnp.float32).reshape(B, nc, 1, C)
        m_spec = pl.BlockSpec((None, None, 1, C), lambda b, c, h: (b, c, 0, 0))
        kernel = functools.partial(_block_attn_kernel, scale=scale)
        return pl.pallas_call(
            kernel,
            out_shape=out_shape,
            grid_spec=pltpu.PrefetchScalarGridSpec(
                num_scalar_prefetch=0, grid=grid,
                in_specs=[qkv_spec, qkv_spec, qkv_spec, m_spec],
                out_specs=qkv_spec),
            compiler_params=cparams,
        )(q, k, v, mask_c)

    assert C % 2 == 0
    w = C // 2
    n_hc = 2 * nc
    # Half-chunk views (free reshapes — no padded HBM copies): chunk c needs
    # exactly the keys in [c*C - w, (c+1)*C + w) = half-chunks 2c-1 .. 2c+2,
    # clamped at the sequence edges where the shifted contribution has
    # weight 0 anyway.
    kh = k.reshape(B, H, n_hc, w, D)
    vh = v.reshape(B, H, n_hc, w, D)
    mh = mask.astype(jnp.float32).reshape(B, n_hc, 1, w)

    def kv_spec(off):
        def imap(b, c, h):
            hc = jnp.minimum(jnp.maximum(2 * c + off, 0), n_hc - 1)
            return (b, h, hc, 0, 0)
        return pl.BlockSpec((None, ht, None, w, D), imap)

    def m_spec(off):
        def imap(b, c, h):
            hc = jnp.minimum(jnp.maximum(2 * c + off, 0), n_hc - 1)
            return (b, hc, 0, 0)
        return pl.BlockSpec((None, None, 1, w), imap)

    offs = (-1, 0, 1, 2)
    kernel = functools.partial(_block_attn_overlap_kernel, scale=scale, w=w)
    return pl.pallas_call(
        kernel,
        out_shape=out_shape,
        grid_spec=pltpu.PrefetchScalarGridSpec(
            num_scalar_prefetch=0, grid=grid,
            in_specs=([qkv_spec]
                      + [kv_spec(o) for o in offs]
                      + [kv_spec(o) for o in offs]
                      + [m_spec(o) for o in offs]),
            out_specs=qkv_spec),
        compiler_params=cparams,
    )(q, kh, kh, kh, kh, vh, vh, vh, vh, mh, mh, mh, mh)


# -------------- pure-JAX reference (mirrors the PyTorch code) --------------
def _ref_block_forward(q, k, v, mask, chunk):
    B, H, T, D = q.shape
    nc = T // chunk
    qc = q.reshape(B, H, nc, chunk, D)
    kc = k.reshape(B, H, nc, chunk, D)
    vc = v.reshape(B, H, nc, chunk, D)
    mc = mask.reshape(B, 1, nc, 1, chunk)
    s = jnp.einsum('bhncd,bhnkd->bhnck', qc, kc) / math.sqrt(D) + mc
    p = jax.nn.softmax(s, axis=-1)
    return jnp.einsum('bhnck,bhnkd->bhncd', p, vc).reshape(B, H, T, D)


def _ref_block_local_attention(q, k, v, mask, chunk, overlap):
    ctx = _ref_block_forward(q, k, v, mask, chunk)
    if overlap:
        w = chunk // 2
        bot, top, mid = ctx[:, :, :w], ctx[:, :, -w:], 0.5 * ctx[:, :, w:-w]
        mid = mid + 0.5 * _ref_block_forward(
            q[:, :, w:-w], k[:, :, w:-w], v[:, :, w:-w], mask[..., w:-w], chunk)
        ctx = jnp.concatenate([bot, mid, top], axis=-2)
    return ctx


if __name__ == "__main__":
    def run_case(B, H, T, D, C, dtype, tol):
        key = jax.random.PRNGKey(0)
        kq, kk, kv, km = jax.random.split(key, 4)
        q32 = jax.random.normal(kq, (B, H, T, D), dtype=jnp.float32)
        k32 = jax.random.normal(kk, (B, H, T, D), dtype=jnp.float32)
        v32 = jax.random.normal(kv, (B, H, T, D), dtype=jnp.float32)
        # additive attention mask: 0 for kept tokens, -1e4 for masked tokens
        masked_bits = jax.random.bernoulli(km, 0.2, (B, 1, 1, T))
        attn_mask = jnp.where(masked_bits, -1e4, 0.0).astype(jnp.float32)

        q = q32.astype(dtype); k = k32.astype(dtype); v = v32.astype(dtype)
        # reference uses the (possibly quantized) streams upcast to f32
        qr, kr, vr = (x.astype(jnp.float32) for x in (q, k, v))

        for overlap in (False, True):
            out = block_local_attention(q, k, v, attn_mask, C, overlap=overlap)
            out = jax.block_until_ready(out)
            ref = _ref_block_local_attention(qr, kr, vr, attn_mask, C, overlap)
            assert out.shape == (B, H, T, D)
            assert jnp.allclose(out.astype(jnp.float32), ref,
                                rtol=tol, atol=tol), \
                f"mismatch vs reference (dtype={dtype}, overlap={overlap})"

    # Module's demo config: sequence_len=16, chunk_size=8, f32 streams.
    run_case(B=2, H=2, T=16, D=32, C=8, dtype=jnp.float32, tol=2e-3)
    # bf16 streams (chunk_size must be a multiple of 16 for bf16 tiling).
    run_case(B=2, H=4, T=64, D=32, C=16, dtype=jnp.bfloat16, tol=2e-2)

    print("KERNEL_OK")
</pallas_src>

<mosaic_0001>
module attributes {stable_mosaic.version = 11 : i64} {
  func.func @_block_attn_kernel(%arg0: i32, %arg1: i32, %arg2: i32, %arg3: memref<1x2x8x32xf32, #tpu.memory_space<vmem>>, %arg4: memref<1x2x8x32xf32, #tpu.memory_space<vmem>>, %arg5: memref<1x2x8x32xf32, #tpu.memory_space<vmem>>, %arg6: memref<1x1x1x8xf32, #tpu.memory_space<vmem>>, %arg7: memref<1x2x8x32xf32, #tpu.memory_space<vmem>>) attributes {dimension_semantics = [#tpu.dimension_semantics<parallel>, #tpu.dimension_semantics<parallel>, #tpu.dimension_semantics<parallel>], iteration_bounds = array<i64: 2, 2, 1>, scalar_prefetch = 0 : i64, scratch_operands = 0 : i64, tpu.core_type = #tpu.core_type<tc>, window_params = [{transform_indices = @transform_0, window_bounds = array<i64: 1, 2, 8, 32>}, {transform_indices = @transform_1, window_bounds = array<i64: 1, 2, 8, 32>}, {transform_indices = @transform_2, window_bounds = array<i64: 1, 2, 8, 32>}, {transform_indices = @transform_3, window_bounds = array<i64: 1, 1, 1, 8>}, {transform_indices = @transform_4, window_bounds = array<i64: 1, 2, 8, 32>}]} {
    %c0 = arith.constant 0 : index
    %c0_0 = arith.constant 0 : index
    %c0_1 = arith.constant 0 : index
    %c0_2 = arith.constant 0 : index
    %0 = vector.load %arg3[%c0, %c0_0, %c0_1, %c0_2] : memref<1x2x8x32xf32, #tpu.memory_space<vmem>>, vector<1x2x8x32xf32>
    %1 = vector.shape_cast %0 : vector<1x2x8x32xf32> to vector<2x8x32xf32>
    %c0_3 = arith.constant 0 : index
    %c0_4 = arith.constant 0 : index
    %c0_5 = arith.constant 0 : index
    %c0_6 = arith.constant 0 : index
    %2 = vector.load %arg4[%c0_3, %c0_4, %c0_5, %c0_6] : memref<1x2x8x32xf32, #tpu.memory_space<vmem>>, vector<1x2x8x32xf32>
    %3 = vector.shape_cast %2 : vector<1x2x8x32xf32> to vector<2x8x32xf32>
    %c0_7 = arith.constant 0 : index
    %c0_8 = arith.constant 0 : index
    %c0_9 = arith.constant 0 : index
    %c0_10 = arith.constant 0 : index
    %4 = vector.load %arg5[%c0_7, %c0_8, %c0_9, %c0_10] : memref<1x2x8x32xf32, #tpu.memory_space<vmem>>, vector<1x2x8x32xf32>
    %5 = vector.shape_cast %4 : vector<1x2x8x32xf32> to vector<2x8x32xf32>
    %c0_11 = arith.constant 0 : index
    %c0_12 = arith.constant 0 : index
    %c0_13 = arith.constant 0 : index
    %c0_14 = arith.constant 0 : index
    %6 = vector.load %arg6[%c0_11, %c0_12, %c0_13, %c0_14] : memref<1x1x1x8xf32, #tpu.memory_space<vmem>>, vector<1x1x1x8xf32>
    %7 = vector.shape_cast %6 : vector<1x1x1x8xf32> to vector<1x8xf32>
    "tpu.trace_start"() <{level = 10 : i32, message = "hrd,hcd->hrc"}> : () -> ()
    %cst = arith.constant dense<0.000000e+00> : vector<2x8x8xf32>
    %8 = tpu.matmul %1, %3, %cst {dimension_numbers = #tpu.dot_dimension_numbers<[2], [2], [1], [1], [0, 0, 0, 1, 1, 1], [0], [0]>} : vector<2x8x32xf32>, vector<2x8x32xf32>, vector<2x8x8xf32> -> vector<2x8x8xf32>
    "tpu.trace_stop"() : () -> ()
    %cst_15 = arith.constant 0.176776692 : f32
    %9 = vector.broadcast %cst_15 : f32 to vector<2x8x8xf32>
    %10 = arith.mulf %8, %9 : vector<2x8x8xf32>
    %11 = vector.shape_cast %7 : vector<1x8xf32> to vector<1x1x8xf32>
    %12 = vector.broadcast %11 : vector<1x1x8xf32> to vector<2x8x8xf32>
    %13 = arith.addf %10, %12 : vector<2x8x8xf32>
    %cst_16 = arith.constant dense<0xFF800000> : vector<2x8xf32>
    %14 = vector.multi_reduction <maximumf>, %13, %cst_16 [2] : vector<2x8x8xf32> to vector<2x8xf32>
    %15 = vector.shape_cast %14 : vector<2x8xf32> to vector<2x8x1xf32>
    %16 = vector.broadcast %15 : vector<2x8x1xf32> to vector<2x8x8xf32>
    %17 = arith.subf %13, %16 : vector<2x8x8xf32>
    %18 = math.exp %17 : vector<2x8x8xf32>
    %cst_17 = arith.constant dense<0.000000e+00> : vector<2x8xf32>
    %19 = vector.multi_reduction <add>, %18, %cst_17 [2] : vector<2x8x8xf32> to vector<2x8xf32>
    %20 = vector.shape_cast %19 : vector<2x8xf32> to vector<2x8x1xf32>
    "tpu.trace_start"() <{level = 10 : i32, message = "hrc,hcd->hrd"}> : () -> ()
    %cst_18 = arith.constant dense<0.000000e+00> : vector<2x8x32xf32>
    %21 = tpu.matmul %18, %5, %cst_18 {dimension_numbers = #tpu.dot_dimension_numbers<[2], [1], [1], [2], [0, 0, 0, 1, 1, 2], [0], [0]>} : vector<2x8x8xf32>, vector<2x8x32xf32>, vector<2x8x32xf32> -> vector<2x8x32xf32>
    "tpu.trace_stop"() : () -> ()
    %22 = tpu.reciprocal %20 : vector<2x8x1xf32> -> vector<2x8x1xf32>
    %23 = vector.broadcast %22 : vector<2x8x1xf32> to vector<2x8x32xf32>
    %24 = arith.mulf %21, %23 : vector<2x8x32xf32>
    %c0_19 = arith.constant 0 : index
    %c0_20 = arith.constant 0 : index
    %c0_21 = arith.constant 0 : index
    %c0_22 = arith.constant 0 : index
    %25 = vector.load %arg7[%c0_19, %c0_20, %c0_21, %c0_22] : memref<1x2x8x32xf32, #tpu.memory_space<vmem>>, vector<1x2x8x32xf32>
    %26 = vector.shape_cast %25 : vector<1x2x8x32xf32> to vector<2x8x32xf32>
    %27 = vector.shape_cast %24 : vector<2x8x32xf32> to vector<1x2x8x32xf32>
    tpu.vector_store %arg7[%c0_19, %c0_20, %c0_21, %c0_22], %27 {strides = array<i32>} : memref<1x2x8x32xf32, #tpu.memory_space<vmem>>, vector<1x2x8x32xf32>,
    return
  }
  func.func @transform_0(%arg0: i32, %arg1: i32, %arg2: i32) -> (i32, i32, i32, i32) {
    %c0_i32 = arith.constant 0 : i32
    %c0_i32_0 = arith.constant 0 : i32
    return %arg0, %arg2, %arg1, %c0_i32 : i32, i32, i32, i32
  }
  func.func @transform_1(%arg0: i32, %arg1: i32, %arg2: i32) -> (i32, i32, i32, i32) {
    %c0_i32 = arith.constant 0 : i32
    %c0_i32_0 = arith.constant 0 : i32
    return %arg0, %arg2, %arg1, %c0_i32 : i32, i32, i32, i32
  }
  func.func @transform_2(%arg0: i32, %arg1: i32, %arg2: i32) -> (i32, i32, i32, i32) {
    %c0_i32 = arith.constant 0 : i32
    %c0_i32_0 = arith.constant 0 : i32
    return %arg0, %arg2, %arg1, %c0_i32 : i32, i32, i32, i32
  }
  func.func @transform_3(%arg0: i32, %arg1: i32, %arg2: i32) -> (i32, i32, i32, i32) {
    %c0_i32 = arith.constant 0 : i32
    %c0_i32_0 = arith.constant 0 : i32
    %c0_i32_1 = arith.constant 0 : i32
    return %arg0, %arg1, %c0_i32, %c0_i32_0 : i32, i32, i32, i32
  }
  func.func @transform_4(%arg0: i32, %arg1: i32, %arg2: i32) -> (i32, i32, i32, i32) {
    %c0_i32 = arith.constant 0 : i32
    %c0_i32_0 = arith.constant 0 : i32
    return %arg0, %arg2, %arg1, %c0_i32 : i32, i32, i32, i32
  }
}

</mosaic_0001>

<llo_original>
// kernel: tpu_custom_call.1
$region0: #{tpu_custom_call.1}
  #allocation0 [shape = 'u32[]', space=smem, size = 0x4, offset = 0x4, fixed_abs, tag = 'smem constant byte address 0x4 - core index']
  #allocation1 [shape = 'u32[144,128]{1,0:T(1,128)}', space=vmem, size = 0x12000, scoped, tag = 'internal scratch']
  %s0 = inlined_call_operand.hbm [shape: f32[2,2,16,32], index: 0, kind: input, shape index: {}]
  %s1 = inlined_call_operand.hbm [shape: f32[2,2,16,32], index: 1, kind: input, shape index: {}]
  %s2 = inlined_call_operand.hbm [shape: f32[2,2,16,32], index: 2, kind: input, shape index: {}]
  %s3 = inlined_call_operand.vmem [shape: f32[2,2,1,8], index: 3, kind: input, shape index: {}]
  %s4 = inlined_call_operand.hbm [shape: f32[2,2,16,32], index: 4, kind: output, shape index: {}]
  %s5 = sld [smem:[#allocation0]]
  $region61: #{tpu_custom_call.1} parent=0
    _
  %s7 = ssub.s32 1, %s5
  %s8 = scalar_select 0, %s7, %s5
  $region1: #{tpu_custom_call.1} parent=0
    #allocation2 [shape = 'u8[16384]{0}', space=vmem, size = 0x4000, scoped, tag = 'input window, operand 0']
    #allocation3 [shape = 's32[2]{0}', space=sflag, size = 0x8, scoped, tag = 'scoped memory for tpu_custom_call.1']
    #allocation4 [shape = 's32[2]{0}', space=sflag, size = 0x8, scoped, tag = 'scoped memory for tpu_custom_call.1']
    #allocation5 [shape = 'u8[16384]{0}', space=vmem, size = 0x4000, scoped, tag = 'input window, operand 1']
    #allocation6 [shape = 's32[2]{0}', space=sflag, size = 0x8, scoped, tag = 'scoped memory for tpu_custom_call.1']
    #allocation7 [shape = 'u8[16384]{0}', space=vmem, size = 0x4000, scoped, tag = 'input window, operand 2']
    #allocation8 [shape = 'u8[16384]{0}', space=vmem, size = 0x4000, scoped, tag = 'output window, operand 0']
    %9 = vsyncpa [#allocation3], 0
    %s10 = scalar_lea.sflag [#allocation3], 1
    %11 = vsyncpa %s10, 0
    %12 = vsyncpa [#allocation6], 0
    %s13 = scalar_lea.sflag [#allocation6], 1
    %14 = vsyncpa %s13, 0
    %15 = vsyncpa [#allocation4], 0
    %s16 = scalar_lea.sflag [#allocation4], 1
    %17 = vsyncpa %s16, 0
    loop: start=0, step=1, limit=6
    $region2: #{tpu_custom_call.1} parent=1 // loop_pre_header
      _
    $region3: #{tpu_custom_call.1} parent=1 // loop_header
      %s19 = sphi 0, %s23
      %p20 = scmp.ge.s32.totalorder %s19, 6
      %s26 = sphi 0, %s45
      %s27 = sphi 0, %s41
      %s28 = sphi 0, %s37
      %s29 = sphi 0, %s26
      %s30 = sphi 0, %s27
      %s31 = sphi 0, %s28
      %s32 = sphi 0, %s29
      %s33 = sphi 0, %s30
      %s34 = sphi 0, %s31
      %s52 = sphi 0, %s54
      %s55 = sphi 0, %s52
      %s56 = sphi 0, %s55
      %s72 = sphi 0, %s56
      %s82 = sphi 0, %s84
      %s85 = sphi 0, %s82
      %s86 = sphi 0, %s85
      %s102 = sphi 0, %s86
      %s112 = sphi 0, %s114
      %s115 = sphi 0, %s112
      %s116 = sphi 0, %s115
      %s132 = sphi 0, %s116
      %s140 = sphi 0, %s142
      %s143 = sphi 0, %s140
      %s144 = sphi 0, %s143
      %s160 = sphi 0, %s144
      %s170 = sphi 0, %s172
      %s173 = sphi 0, %s170
      %s174 = sphi 0, %s173
      %s190 = sphi 0, %s174
    $region4: #{tpu_custom_call.1} parent=1 // loop_header_branch
      %22 = sbr.rel (%p20) target = $region8
    $region5: #{tpu_custom_call.1} parent=1 // loop_body
      %s24 = ssub.s32 %s19, 1
      %s25 = ssub.s32 %s19, 2
      %s35 = sadd.s32 1, %s28
      %p36 = scmp.ge.s32.totalorder %s35, 1
      %s37 = scalar_select %p36, 0, %s35
      %s38 = sadd.s32 1, %s27
      %s39 = scalar_select %p36, %s38, %s27
      %p40 = scmp.ge.s32.totalorder %s39, 2
      %s41 = scalar_select %p40, 0, %s39
      %s42 = sadd.s32 1, %s26
      %s43 = scalar_select %p40, %s42, %s26
      %p44 = scmp.ge.s32.totalorder %s43, 2
      %s45 = scalar_select %p44, 0, %s43
      %s46 = ssub.s32 %s26, %s45
      %s47 = ssub.s32 %s28, %s37
      %s48 = sor.u32 %s46, %s47
      %s49 = ssub.s32 %s27, %s41
      %s50 = sor.u32 %s48, %s49
      %p51 = scmp.eq.s32.totalorder %s50, 0
      %s53 = sadd.s32 %s52, 1
      %s54 = scalar_select %p51, %s52, %s53
      %p57 = pneg %p51
      %p58 = scmp.eq.s32.totalorder %s19, 3
      %p59 = por %p57, %p58
      %p60 = scmp.ne.s32.totalorder %s52, %s55
      %p61 = scmp.eq.s32.totalorder %s19, 0
      %p62 = por %p60, %p61
      %p63 = scmp.ne.s32.totalorder %s52, %s55
      %p64 = scmp.eq.s32.totalorder %s24, 3
      %p65 = por %p63, %p64
      %p66 = scmp.ne.s32.totalorder %s55, %s56
      %p67 = scmp.eq.s32.totalorder %s24, 0
      %p68 = por %p66, %p67
      %p69 = scmp.ne.s32.totalorder %s55, %s56
      %p70 = scmp.eq.s32.totalorder %s25, 3
      %p71 = por %p69, %p70
      %p73 = scmp.ne.s32.totalorder %s56, %s72
      %p74 = scmp.eq.s32.totalorder %s25, 0
      %p75 = por %p73, %p74
      %s76 = ssub.s32 %s26, %s45
      %s77 = ssub.s32 %s28, %s37
      %s78 = sor.u32 %s76, %s77
      %s79 = ssub.s32 %s27, %s41
      %s80 = sor.u32 %s78, %s79
      %p81 = scmp.eq.s32.totalorder %s80, 0
      %s83 = sadd.s32 %s82, 1
      %s84 = scalar_select %p81, %s82, %s83
      %p87 = pneg %p81
      %p88 = scmp.eq.s32.totalorder %s19, 3
      %p89 = por %p87, %p88
      %p90 = scmp.ne.s32.totalorder %s82, %s85
      %p91 = scmp.eq.s32.totalorder %s19, 0
      %p92 = por %p90, %p91
      %p93 = scmp.ne.s32.totalorder %s82, %s85
      %p94 = scmp.eq.s32.totalorder %s24, 3
      %p95 = por %p93, %p94
      %p96 = scmp.ne.s32.totalorder %s85, %s86
      %p97 = scmp.eq.s32.totalorder %s24, 0
      %p98 = por %p96, %p97
      %p99 = scmp.ne.s32.totalorder %s85, %s86
      %p100 = scmp.eq.s32.totalorder %s25, 3
      %p101 = por %p99, %p100
      %p103 = scmp.ne.s32.totalorder %s86, %s102
      %p104 = scmp.eq.s32.totalorder %s25, 0
      %p105 = por %p103, %p104
      %s106 = ssub.s32 %s26, %s45
      %s107 = ssub.s32 %s28, %s37
      %s108 = sor.u32 %s106, %s107
      %s109 = ssub.s32 %s27, %s41
      %s110 = sor.u32 %s108, %s109
      %p111 = scmp.eq.s32.totalorder %s110, 0
      %s113 = sadd.s32 %s112, 1
      %s114 = scalar_select %p111, %s112, %s113
      %p117 = pneg %p111
      %p118 = scmp.eq.s32.totalorder %s19, 3
      %p119 = por %p117, %p118
      %p120 = scmp.ne.s32.totalorder %s112, %s115
      %p121 = scmp.eq.s32.totalorder %s19, 0
      %p122 = por %p120, %p121
      %p123 = scmp.ne.s32.totalorder %s112, %s115
      %p124 = scmp.eq.s32.totalorder %s24, 3
      %p125 = por %p123, %p124
      %p126 = scmp.ne.s32.totalorder %s115, %s116
      %p127 = scmp.eq.s32.totalorder %s24, 0
      %p128 = por %p126, %p127
      %p129 = scmp.ne.s32.totalorder %s115, %s116
      %p130 = scmp.eq.s32.totalorder %s25, 3
      %p131 = por %p129, %p130
      %p133 = scmp.ne.s32.totalorder %s116, %s132
      %p134 = scmp.eq.s32.totalorder %s25, 0
      %p135 = por %p133, %p134
      %s136 = ssub.s32 %s26, %s45
      %s137 = ssub.s32 %s27, %s41
      %s138 = sor.u32 %s136, %s137
      %p139 = scmp.eq.s32.totalorder %s138, 0
      %s141 = sadd.s32 %s140, 1
      %s142 = scalar_select %p139, %s140, %s141
      %p145 = pneg %p139
      %p146 = scmp.eq.s32.totalorder %s19, 3
      %p147 = por %p145, %p146
      %p148 = scmp.ne.s32.totalorder %s140, %s143
      %p149 = scmp.eq.s32.totalorder %s19, 0
      %p150 = por %p148, %p149
      %p151 = scmp.ne.s32.totalorder %s140, %s143
      %p152 = scmp.eq.s32.totalorder %s24, 3
      %p153 = por %p151, %p152
      %p154 = scmp.ne.s32.totalorder %s143, %s144
      %p155 = scmp.eq.s32.totalorder %s24, 0
      %p156 = por %p154, %p155
      %p157 = scmp.ne.s32.totalorder %s143, %s144
      %p158 = scmp.eq.s32.totalorder %s25, 3
      %p159 = por %p157, %p158
      %p161 = scmp.ne.s32.totalorder %s144, %s160
      %p162 = scmp.eq.s32.totalorder %s25, 0
      %p163 = por %p161, %p162
      %s164 = ssub.s32 %s26, %s45
      %s165 = ssub.s32 %s28, %s37
      %s166 = sor.u32 %s164, %s165
      %s167 = ssub.s32 %s27, %s41
      %s168 = sor.u32 %s166, %s167
      %p169 = scmp.eq.s32.totalorder %s168, 0
      %s171 = sadd.s32 %s170, 1
      %s172 = scalar_select %p169, %s170, %s171
      %p175 = pneg %p169
      %p176 = scmp.eq.s32.totalorder %s19, 3
      %p177 = por %p175, %p176
      %p178 = scmp.ne.s32.totalorder %s170, %s173
      %p179 = scmp.eq.s32.totalorder %s19, 0
      %p180 = por %p178, %p179
      %p181 = scmp.ne.s32.totalorder %s170, %s173
      %p182 = scmp.eq.s32.totalorder %s24, 3
      %p183 = por %p181, %p182
      %p184 = scmp.ne.s32.totalorder %s173, %s174
      %p185 = scmp.eq.s32.totalorder %s24, 0
      %p186 = por %p184, %p185
      %p187 = scmp.ne.s32.totalorder %s173, %s174
      %p188 = scmp.eq.s32.totalorder %s25, 3
      %p189 = por %p187, %p188
      %p191 = scmp.ne.s32.totalorder %s174, %s190
      %p192 = scmp.eq.s32.totalorder %s25, 0
      %p193 = por %p191, %p192
      %p194 = scmp.le.s32.totalorder 1, %s19
      %p195 = scmp.lt.s32.totalorder %s19, 5
      %p196 = pnand %p194, %p195
      %p197 = pneg %p196
      // Predicated region
      $region9: #{tpu_custom_call.1} parent=5 // pred_check
        _
      $region10: #{tpu_custom_call.1} parent=5 // pred_check_branch
        %199 = sbr.rel (%p196) target = $region12
      $region11: #{tpu_custom_call.1} parent=5 // pred_region
        %s200 = ssub.s32 %s19, 1
      $region12: #{tpu_custom_call.1} parent=5 // pred_fallthru
        _
      %p201 = scmp.lt.s32.totalorder %s19, 4
      // Predicated region
      $region13: #{tpu_custom_call.1} parent=5 // pred_check
        %p202 = pneg %p201
      $region14: #{tpu_custom_call.1} parent=5 // pred_check_branch
        %204 = sbr.rel (%p202) target = $region16
      $region15: #{tpu_custom_call.1} parent=5 // pred_region
        // Predicated region
        $region17: #{tpu_custom_call.1} parent=15 // pred_check
          %p205 = pneg %p62
        $region18: #{tpu_custom_call.1} parent=15 // pred_check_branch
          %207 = sbr.rel (%p205) target = $region20
        $region19: #{tpu_custom_call.1} parent=15 // pred_region
          %s208 = sand.u32 %s52, 1
          %s209 = scalar_lea.sflag [#allocation3], %s208
          %s210 = sand.u32 %s52, 1
          %s211 = smul.addr %s210, 16
          %s212 = scalar_lea.vmem [#allocation2], %s211
          %s213 = smul.u32 2, %s28
          %s215 = ssub.s32 256, 256
          %216 = vsyncadd %s209, %s215
          %s217 = smul.addr %s213, 2
          %s218 = sadd.s32 %s27, %s217
          %s219 = smul.addr %s26, 4
          %s220 = sadd.s32 %s218, %s219
          %s221 = smul.addr %s220, 128
          %s222 = scalar_lea.hbm %s0, %s221
          %s223 = sshll.u32 %s212, 4
          %s224 = int_to_ptr.vmem [resolvable:$true] %s223
          %229 = dma.hbm_to_vmem [thread:$0]  %s222, 256, %s224, %s209, 256, 128, 8
        $region20: #{tpu_custom_call.1} parent=15 // pred_fallthru
          _
        // Predicated region
        $region21: #{tpu_custom_call.1} parent=15 // pred_check
          %p230 = pneg %p92
        $region22: #{tpu_custom_call.1} parent=15 // pred_check_branch
          %232 = sbr.rel (%p230) target = $region24
        $region23: #{tpu_custom_call.1} parent=15 // pred_region
          %s233 = sand.u32 %s19, 1
          %s234 = scalar_lea.sflag [#allocation6], %s233
          %s235 = sand.u32 %s82, 1
          %s236 = smul.addr %s235, 16
          %s237 = scalar_lea.vmem [#allocation5], %s236
          %s238 = smul.u32 2, %s28
          %s240 = ssub.s32 256, 256
          %241 = vsyncadd %s234, %s240
          %s242 = smul.addr %s238, 2
          %s243 = sadd.s32 %s27, %s242
          %s244 = smul.addr %s26, 4
          %s245 = sadd.s32 %s243, %s244
          %s246 = smul.addr %s245, 128
          %s247 = scalar_lea.hbm %s1, %s246
          %s248 = sshll.u32 %s237, 4
          %s249 = int_to_ptr.vmem [resolvable:$true] %s248
          %254 = dma.hbm_to_vmem [thread:$0]  %s247, 256, %s249, %s234, 256, 128, 8
        $region24: #{tpu_custom_call.1} parent=15 // pred_fallthru
          _
        // Predicated region
        $region25: #{tpu_custom_call.1} parent=15 // pred_check
          %p255 = pneg %p122
        $region26: #{tpu_custom_call.1} parent=15 // pred_check_branch
          %257 = sbr.rel (%p255) target = $region28
        $region27: #{tpu_custom_call.1} parent=15 // pred_region
          %s258 = sand.u32 %s19, 1
          %s259 = scalar_lea.sflag [#allocation6], %s258
          %s260 = sand.u32 %s112, 1
          %s261 = smul.addr %s260, 16
          %s262 = scalar_lea.vmem [#allocation7], %s261
          %s263 = smul.u32 2, %s28
          %s265 = ssub.s32 256, 256
          %266 = vsyncadd %s259, %s265
          %s267 = smul.addr %s263, 2
          %s268 = sadd.s32 %s27, %s267
          %s269 = smul.addr %s26, 4
          %s270 = sadd.s32 %s268, %s269
          %s271 = smul.addr %s270, 128
          %s272 = scalar_lea.hbm %s2, %s271
          %s273 = sshll.u32 %s262, 4
          %s274 = int_to_ptr.vmem [resolvable:$true] %s273
          %279 = dma.hbm_to_vmem [thread:$0]  %s272, 256, %s274, %s259, 256, 128, 8
        $region28: #{tpu_custom_call.1} parent=15 // pred_fallthru
          _
        // Predicated region
        $region29: #{tpu_custom_call.1} parent=15 // pred_check
          %p280 = pneg %p150
        $region30: #{tpu_custom_call.1} parent=15 // pred_check_branch
          %282 = sbr.rel (%p280) target = $region32
        $region31: #{tpu_custom_call.1} parent=15 // pred_region
          %p283 = scmp.lt.s32.totalorder %s26, 1
          %s284 = scalar_select %p283, %s26, 1
          %p285 = scmp.lt.s32.totalorder %s27, 1
          %s286 = scalar_select %p285, %s27, 1
          %s287 = smul.addr %s284, 2
          %s288 = sadd.s32 %s286, %s287
          %s289 = scalar_lea.vmem %s3, %s288
        $region32: #{tpu_custom_call.1} parent=15 // pred_fallthru
          _
      $region16: #{tpu_custom_call.1} parent=5 // pred_fallthru
        _
      %p290 = scmp.le.s32.totalorder 1, %s19
      %p291 = scmp.lt.s32.totalorder %s19, 5
      %p292 = pnand %p290, %p291
      %p293 = pneg %p292
      // Predicated region
      $region33: #{tpu_custom_call.1} parent=5 // pred_check
        _
      $region34: #{tpu_custom_call.1} parent=5 // pred_check_branch
        %295 = sbr.rel (%p292) target = $region36
      $region35: #{tpu_custom_call.1} parent=5 // pred_region
        %s296 = ssub.s32 %s19, 1
        %s297 = sand.u32 %s55, 1
        %s298 = scalar_lea.sflag [#allocation3], %s297
        %s299 = sand.u32 %s55, 1
        %s300 = smul.addr %s299, 16
        %s301 = scalar_lea.vmem [#allocation2], %s300
        // Predicated region
        $region37: #{tpu_custom_call.1} parent=35 // pred_check
          %p302 = pneg %p68
        $region38: #{tpu_custom_call.1} parent=35 // pred_check_branch
          %304 = sbr.rel (%p302) target = $region40
        $region39: #{tpu_custom_call.1} parent=35 // pred_region
          %305 = dma.done %s298, 256
        $region40: #{tpu_custom_call.1} parent=35 // pred_fallthru
          _
        %s306 = sand.u32 %s24, 1
        %s307 = scalar_lea.sflag [#allocation6], %s306
        %s308 = sand.u32 %s85, 1
        %s309 = smul.addr %s308, 16
        %s310 = scalar_lea.vmem [#allocation5], %s309
        // Predicated region
        $region41: #{tpu_custom_call.1} parent=35 // pred_check
          %p311 = pneg %p98
        $region42: #{tpu_custom_call.1} parent=35 // pred_check_branch
          %313 = sbr.rel (%p311) target = $region44
        $region43: #{tpu_custom_call.1} parent=35 // pred_region
          %314 = dma.done %s307, 256
        $region44: #{tpu_custom_call.1} parent=35 // pred_fallthru
          _
        %s315 = sand.u32 %s24, 1
        %s316 = scalar_lea.sflag [#allocation6], %s315
        %s317 = sand.u32 %s115, 1
        %s318 = smul.addr %s317, 16
        %s319 = scalar_lea.vmem [#allocation7], %s318
        // Predicated region
        $region45: #{tpu_custom_call.1} parent=35 // pred_check
          %p320 = pneg %p128
        $region46: #{tpu_custom_call.1} parent=35 // pred_check_branch
          %322 = sbr.rel (%p320) target = $region48
        $region47: #{tpu_custom_call.1} parent=35 // pred_region
          %323 = dma.done %s316, 256
        $region48: #{tpu_custom_call.1} parent=35 // pred_fallthru
          _
        %s324 = sand.u32 %s55, 1
        %s325 = scalar_lea.sflag [#allocation3], %s324
        %s326 = sand.u32 %s55, 1
        %s327 = smul.addr %s326, 16
        %s328 = scalar_lea.vmem [#allocation2], %s327
        %p329 = pneg %p68
        %p330 = pneg %p65
        %s331 = sand.u32 %s24, 1
        %s332 = scalar_lea.sflag [#allocation6], %s331
        %s333 = sand.u32 %s85, 1
        %s334 = smul.addr %s333, 16
        %s335 = scalar_lea.vmem [#allocation5], %s334
        %p336 = pneg %p98
        %p337 = pneg %p95
        %s338 = sand.u32 %s24, 1
        %s339 = scalar_lea.sflag [#allocation6], %s338
        %s340 = sand.u32 %s115, 1
        %s341 = smul.addr %s340, 16
        %s342 = scalar_lea.vmem [#allocation7], %s341
        %p343 = pneg %p128
        %p344 = pneg %p125
        %p345 = scmp.lt.s32.totalorder %s29, 1
        %s346 = scalar_select %p345, %s29, 1
        %p347 = scmp.lt.s32.totalorder %s30, 1
        %s348 = scalar_select %p347, %s30, 1
        %s349 = smul.addr %s346, 2
        %s350 = sadd.s32 %s348, %s349
        %s351 = scalar_lea.vmem %s3, %s350
        %p352 = pneg %p156
        %p353 = pneg %p153
        %p354 = pneg %p186
        %p355 = pneg %p183
        %s356 = sand.u32 %s173, 1
        %s357 = scalar_lea.sflag [#allocation4], %s356
        %s358 = sand.u32 %s173, 1
        %s359 = smul.addr %s358, 16
        %s360 = scalar_lea.vmem [#allocation8], %s359
        %s361 = smul.u32 2, %s31
        %s362 = smul.u32 2, %s31
        %s363 = smul.u32 2, %s31
        %p364 = scmp.lt.s32.totalorder %s29, 1
        %s365 = scalar_select %p364, %s29, 1
        %p366 = scmp.lt.s32.totalorder %s30, 1
        %s367 = scalar_select %p366, %s30, 1
        %s368 = smul.addr %s365, 2
        %s369 = sadd.s32 %s367, %s368
        %s370 = scalar_lea.vmem %s3, %s369
        %s371 = smul.u32 2, %s31
        %v372 = vld [vmem:[%s301] sm:$0xff]
        %v373 = vld [vmem:[%s301 + $0x8] sm:$0xff]
        %v374 = vld [vmem:[%s310] sm:$0xff]
        %v375 = vld [vmem:[%s310 + $0x8] sm:$0xff]
        %v376 = vld [vmem:[%s319] sm:$0xff]
        %v377 = vld [vmem:[%s319 + $0x8] sm:$0xff]
        %v378 = vld [vmem:[%s370] sm:$0x1]
        %vm379 = vcmask 261120
        %v381 = vsel %vm379, %v372, 0
        %v384 = vsel %vm379, %v374, 0
        %386 = vmatprep.subr.mxu0 0.0
        %387 = vmatpush1.xpose.msra.mxu0 0.0
        %388 = vmatprep.subr.mxu0 0.0
        %389 = vmatpush1.xpose.msra.mxu0 0.0
        %390 = vmatprep.subr.mxu0 0.0
        %391 = vmatpush1.xpose.msra.mxu0 0.0
        %392 = vmatprep.subr.mxu0 0.0
        %393 = vmatpush1.xpose.msra.mxu0 0.0
        %394 = vmatprep.subr.mxu0 0.0
        %395 = vmatpush1.xpose.msra.mxu0 0.0
        %396 = vmatprep.subr.mxu0 0.0
        %397 = vmatpush1.xpose.msra.mxu0 0.0
        %398 = vmatprep.subr.mxu0 0.0
        %399 = vmatpush1.xpose.msra.mxu0 0.0
        %400 = vmatprep.subr.mxu0 0.0
        %401 = vmatpush1.xpose.msra.mxu0 0.0
        %402 = vmatprep.subr.mxu0 0.0
        %403 = vmatpush1.xpose.msra.mxu0 0.0
        %404 = vmatprep.subr.mxu0 0.0
        %405 = vmatpush1.xpose.msra.mxu0 0.0
        %406 = vmatprep.subr.mxu0 0.0
        %407 = vmatpush1.xpose.msra.mxu0 0.0
        %408 = vmatprep.subr.mxu0 0.0
        %409 = vmatpush1.xpose.msra.mxu0 0.0
        %410 = vmatprep.subr.mxu0 0.0
        %411 = vmatpush1.xpose.msra.mxu0 0.0
        %412 = vmatprep.subr.mxu0 0.0
        %413 = vmatpush1.xpose.msra.mxu0 0.0
        %414 = vmatprep.subr.mxu0 0.0
        %415 = vmatpush1.xpose.msra.mxu0 0.0
        %416 = vmatprep.subr.mxu0 0.0
        %417 = vmatpush1.xpose.msra.mxu0 %v384
        %418 = vmatprep.subr.mxu0 0.0
        %419 = vmatpush2.xpose.msra.mxu0 0.0
        %420 = vmatprep.subr.mxu0 0.0
        %421 = vmatpush2.xpose.msra.mxu0 0.0
        %422 = vmatprep.subr.mxu0 0.0
        %423 = vmatpush2.xpose.msra.mxu0 0.0
        %424 = vmatprep.subr.mxu0 0.0
        %425 = vmatpush2.xpose.msra.mxu0 0.0
        %426 = vmatprep.subr.mxu0 0.0
        %427 = vmatpush2.xpose.msra.mxu0 0.0
        %428 = vmatprep.subr.mxu0 0.0
        %429 = vmatpush2.xpose.msra.mxu0 0.0
        %430 = vmatprep.subr.mxu0 0.0
        %431 = vmatpush2.xpose.msra.mxu0 0.0
        %432 = vmatprep.subr.mxu0 0.0
        %433 = vmatpush2.xpose.msra.mxu0 0.0
        %434 = vmatprep.subr.mxu0 0.0
        %435 = vmatpush2.xpose.msra.mxu0 0.0
        %436 = vmatprep.subr.mxu0 0.0
        %437 = vmatpush2.xpose.msra.mxu0 0.0
        %438 = vmatprep.subr.mxu0 0.0
        %439 = vmatpush2.xpose.msra.mxu0 0.0
        %440 = vmatprep.subr.mxu0 0.0
        %441 = vmatpush2.xpose.msra.mxu0 0.0
        %442 = vmatprep.subr.mxu0 0.0
        %443 = vmatpush2.xpose.msra.mxu0 0.0
        %444 = vmatprep.subr.mxu0 0.0
        %445 = vmatpush2.xpose.msra.mxu0 0.0
        %446 = vmatprep.subr.mxu0 0.0
        %447 = vmatpush2.xpose.msra.mxu0 0.0
        %448 = vmatprep.subr.mxu0 0.0
        %449 = vmatpush2.xpose.msra.mxu0 0.0
        %450 = vmatprep.mubr.f32.mxu0 0.0
        %451 = vmatmul.mubr.f32.gmra.mxu0 %v381
        %v452 = vpop.f32.mrf.mxu0
        %v453 = vadd.f32 0.0, %v452
        %v454 = vpop.f32.mrf.mxu0
        %455 = vdwg.mxu0
        %v457 = vsel %vm379, %v373, 0
        %v460 = vsel %vm379, %v375, 0
        %462 = vmatprep.subr.mxu0 0.0
        %463 = vmatpush1.xpose.msra.mxu0 0.0
        %464 = vmatprep.subr.mxu0 0.0
        %465 = vmatpush1.xpose.msra.mxu0 0.0
        %466 = vmatprep.subr.mxu0 0.0
        %467 = vmatpush1.xpose.msra.mxu0 0.0
        %468 = vmatprep.subr.mxu0 0.0
        %469 = vmatpush1.xpose.msra.mxu0 0.0
        %470 = vmatprep.subr.mxu0 0.0
        %471 = vmatpush1.xpose.msra.mxu0 0.0
        %472 = vmatprep.subr.mxu0 0.0
        %473 = vmatpush1.xpose.msra.mxu0 0.0
        %474 = vmatprep.subr.mxu0 0.0
        %475 = vmatpush1.xpose.msra.mxu0 0.0
        %476 = vmatprep.subr.mxu0 0.0
        %477 = vmatpush1.xpose.msra.mxu0 0.0
        %478 = vmatprep.subr.mxu0 0.0
        %479 = vmatpush1.xpose.msra.mxu0 0.0
        %480 = vmatprep.subr.mxu0 0.0
        %481 = vmatpush1.xpose.msra.mxu0 0.0
        %482 = vmatprep.subr.mxu0 0.0
        %483 = vmatpush1.xpose.msra.mxu0 0.0
        %484 = vmatprep.subr.mxu0 0.0
        %485 = vmatpush1.xpose.msra.mxu0 0.0
        %486 = vmatprep.subr.mxu0 0.0
        %487 = vmatpush1.xpose.msra.mxu0 0.0
        %488 = vmatprep.subr.mxu0 0.0
        %489 = vmatpush1.xpose.msra.mxu0 0.0
        %490 = vmatprep.subr.mxu0 0.0
        %491 = vmatpush1.xpose.msra.mxu0 0.0
        %492 = vmatprep.subr.mxu0 0.0
        %493 = vmatpush1.xpose.msra.mxu0 %v460
        %494 = vmatprep.subr.mxu0 0.0
        %495 = vmatpush2.xpose.msra.mxu0 0.0
        %496 = vmatprep.subr.mxu0 0.0
        %497 = vmatpush2.xpose.msra.mxu0 0.0
        %498 = vmatprep.subr.mxu0 0.0
        %499 = vmatpush2.xpose.msra.mxu0 0.0
        %500 = vmatprep.subr.mxu0 0.0
        %501 = vmatpush2.xpose.msra.mxu0 0.0
        %502 = vmatprep.subr.mxu0 0.0
        %503 = vmatpush2.xpose.msra.mxu0 0.0
        %504 = vmatprep.subr.mxu0 0.0
        %505 = vmatpush2.xpose.msra.mxu0 0.0
        %506 = vmatprep.subr.mxu0 0.0
        %507 = vmatpush2.xpose.msra.mxu0 0.0
        %508 = vmatprep.subr.mxu0 0.0
        %509 = vmatpush2.xpose.msra.mxu0 0.0
        %510 = vmatprep.subr.mxu0 0.0
        %511 = vmatpush2.xpose.msra.mxu0 0.0
        %512 = vmatprep.subr.mxu0 0.0
        %513 = vmatpush2.xpose.msra.mxu0 0.0
        %514 = vmatprep.subr.mxu0 0.0
        %515 = vmatpush2.xpose.msra.mxu0 0.0
        %516 = vmatprep.subr.mxu0 0.0
        %517 = vmatpush2.xpose.msra.mxu0 0.0
        %518 = vmatprep.subr.mxu0 0.0
        %519 = vmatpush2.xpose.msra.mxu0 0.0
        %520 = vmatprep.subr.mxu0 0.0
        %521 = vmatpush2.xpose.msra.mxu0 0.0
        %522 = vmatprep.subr.mxu0 0.0
        %523 = vmatpush2.xpose.msra.mxu0 0.0
        %524 = vmatprep.subr.mxu0 0.0
        %525 = vmatpush2.xpose.msra.mxu0 0.0
        %526 = vmatprep.mubr.f32.mxu0 0.0
        %527 = vmatmul.mubr.f32.gmra.mxu0 %v457
        %v528 = vpop.f32.mrf.mxu0
        %v529 = vadd.f32 0.0, %v528
        %v530 = vpop.f32.mrf.mxu0
        %531 = vdwg.mxu0
        %v532 = vmul.f32 %v453, 0.17677669
        %v533 = vmul.f32 %v529, 0.17677669
        %v535 = vlaneseq
        %v536 = vshrl.u32 %v535, 7
        %v537 = vsub.s32 0, %v536
        %v538 = vrot.slane %v378, %v537
        %v540 = vadd.f32 %v532, %v538
        %v541 = vadd.f32 %v533, %v538
        %vm542 = vcmask 64512
        %v543 = vsel %vm542, %v540, -inf
        %544 = vmax.xlane.f32.xlu0 %v543
        %v545 = vpop.xlane.xlu0 %544
        %v546 = vsel %vm542, %v541, -inf
        %547 = vmax.xlane.f32.xlu0 %v546
        %v548 = vpop.xlane.xlu0 %547
        %v549 = vsub.f32 %v540, %v545
        %v550 = vsub.f32 %v541, %v548
        %v551 = vmul.f32 %v549, 1.442695
        %v552 = vpow.pop %v551
        %v553 = vmul.f32 %v550, 1.442695
        %v554 = vpow.pop %v553
        %v555 = vsel %vm542, %v552, 0.0
        %556 = vadd.xlane.f32.xlu0 %v555
        %v557 = vpop.xlane.xlu0 %556
        %v558 = vsel %vm542, %v554, 0.0
        %559 = vadd.xlane.f32.xlu0 %v558
        %v560 = vpop.xlane.xlu0 %559
        %v562 = vsel %vm542, %v552, 0
        %564 = vmatprep.subr.mxu0 0.0
        %565 = vmatpush1.msra.mxu0 0.0
        %566 = vmatprep.subr.mxu0 0.0
        %567 = vmatpush1.msra.mxu0 0.0
        %568 = vmatprep.subr.mxu0 0.0
        %569 = vmatpush1.msra.mxu0 0.0
        %570 = vmatprep.subr.mxu0 0.0
        %571 = vmatpush1.msra.mxu0 0.0
        %572 = vmatprep.subr.mxu0 0.0
        %573 = vmatpush1.msra.mxu0 0.0
        %574 = vmatprep.subr.mxu0 0.0
        %575 = vmatpush1.msra.mxu0 0.0
        %576 = vmatprep.subr.mxu0 0.0
        %577 = vmatpush1.msra.mxu0 0.0
        %578 = vmatprep.subr.mxu0 0.0
        %579 = vmatpush1.msra.mxu0 0.0
        %580 = vmatprep.subr.mxu0 0.0
        %581 = vmatpush1.msra.mxu0 0.0
        %582 = vmatprep.subr.mxu0 0.0
        %583 = vmatpush1.msra.mxu0 0.0
        %584 = vmatprep.subr.mxu0 0.0
        %585 = vmatpush1.msra.mxu0 0.0
        %586 = vmatprep.subr.mxu0 0.0
        %587 = vmatpush1.msra.mxu0 0.0
        %588 = vmatprep.subr.mxu0 0.0
        %589 = vmatpush1.msra.mxu0 0.0
        %590 = vmatprep.subr.mxu0 0.0
        %591 = vmatpush1.msra.mxu0 0.0
        %592 = vmatprep.subr.mxu0 0.0
        %593 = vmatpush1.msra.mxu0 0.0
        %594 = vmatprep.subr.mxu0 0.0
        %595 = vmatpush1.msra.mxu0 %v376
        %596 = vmatprep.subr.mxu0 0.0
        %597 = vmatpush2.msra.mxu0 0.0
        %598 = vmatprep.subr.mxu0 0.0
        %599 = vmatpush2.msra.mxu0 0.0
        %600 = vmatprep.subr.mxu0 0.0
        %601 = vmatpush2.msra.mxu0 0.0
        %602 = vmatprep.subr.mxu0 0.0
        %603 = vmatpush2.msra.mxu0 0.0
        %604 = vmatprep.subr.mxu0 0.0
        %605 = vmatpush2.msra.mxu0 0.0
        %606 = vmatprep.subr.mxu0 0.0
        %607 = vmatpush2.msra.mxu0 0.0
        %608 = vmatprep.subr.mxu0 0.0
        %609 = vmatpush2.msra.mxu0 0.0
        %610 = vmatprep.subr.mxu0 0.0
        %611 = vmatpush2.msra.mxu0 0.0
        %612 = vmatprep.subr.mxu0 0.0
        %613 = vmatpush2.msra.mxu0 0.0
        %614 = vmatprep.subr.mxu0 0.0
        %615 = vmatpush2.msra.mxu0 0.0
        %616 = vmatprep.subr.mxu0 0.0
        %617 = vmatpush2.msra.mxu0 0.0
        %618 = vmatprep.subr.mxu0 0.0
        %619 = vmatpush2.msra.mxu0 0.0
        %620 = vmatprep.subr.mxu0 0.0
        %621 = vmatpush2.msra.mxu0 0.0
        %622 = vmatprep.subr.mxu0 0.0
        %623 = vmatpush2.msra.mxu0 0.0
        %624 = vmatprep.subr.mxu0 0.0
        %625 = vmatpush2.msra.mxu0 0.0
        %626 = vmatprep.subr.mxu0 0.0
        %627 = vmatpush2.msra.mxu0 0.0
        %628 = vmatprep.mubr.f32.mxu0 0.0
        %629 = vmatmul.mubr.f32.gmra.mxu0 %v562
        %v630 = vpop.f32.mrf.mxu0
        %v631 = vadd.f32 0.0, %v630
        %v632 = vpop.f32.mrf.mxu0
        %633 = vdwg.mxu0
        %v635 = vsel %vm542, %v554, 0
        %637 = vmatprep.subr.mxu0 0.0
        %638 = vmatpush1.msra.mxu0 0.0
        %639 = vmatprep.subr.mxu0 0.0
        %640 = vmatpush1.msra.mxu0 0.0
        %641 = vmatprep.subr.mxu0 0.0
        %642 = vmatpush1.msra.mxu0 0.0
        %643 = vmatprep.subr.mxu0 0.0
        %644 = vmatpush1.msra.mxu0 0.0
        %645 = vmatprep.subr.mxu0 0.0
        %646 = vmatpush1.msra.mxu0 0.0
        %647 = vmatprep.subr.mxu0 0.0
        %648 = vmatpush1.msra.mxu0 0.0
        %649 = vmatprep.subr.mxu0 0.0
        %650 = vmatpush1.msra.mxu0 0.0
        %651 = vmatprep.subr.mxu0 0.0
        %652 = vmatpush1.msra.mxu0 0.0
        %653 = vmatprep.subr.mxu0 0.0
        %654 = vmatpush1.msra.mxu0 0.0
        %655 = vmatprep.subr.mxu0 0.0
        %656 = vmatpush1.msra.mxu0 0.0
        %657 = vmatprep.subr.mxu0 0.0
        %658 = vmatpush1.msra.mxu0 0.0
        %659 = vmatprep.subr.mxu0 0.0
        %660 = vmatpush1.msra.mxu0 0.0
        %661 = vmatprep.subr.mxu0 0.0
        %662 = vmatpush1.msra.mxu0 0.0
        %663 = vmatprep.subr.mxu0 0.0
        %664 = vmatpush1.msra.mxu0 0.0
        %665 = vmatprep.subr.mxu0 0.0
        %666 = vmatpush1.msra.mxu0 0.0
        %667 = vmatprep.subr.mxu0 0.0
        %668 = vmatpush1.msra.mxu0 %v377
        %669 = vmatprep.subr.mxu0 0.0
        %670 = vmatpush2.msra.mxu0 0.0
        %671 = vmatprep.subr.mxu0 0.0
        %672 = vmatpush2.msra.mxu0 0.0
        %673 = vmatprep.subr.mxu0 0.0
        %674 = vmatpush2.msra.mxu0 0.0
        %675 = vmatprep.subr.mxu0 0.0
        %676 = vmatpush2.msra.mxu0 0.0
        %677 = vmatprep.subr.mxu0 0.0
        %678 = vmatpush2.msra.mxu0 0.0
        %679 = vmatprep.subr.mxu0 0.0
        %680 = vmatpush2.msra.mxu0 0.0
        %681 = vmatprep.subr.mxu0 0.0
        %682 = vmatpush2.msra.mxu0 0.0
        %683 = vmatprep.subr.mxu0 0.0
        %684 = vmatpush2.msra.mxu0 0.0
        %685 = vmatprep.subr.mxu0 0.0
        %686 = vmatpush2.msra.mxu0 0.0
        %687 = vmatprep.subr.mxu0 0.0
        %688 = vmatpush2.msra.mxu0 0.0
        %689 = vmatprep.subr.mxu0 0.0
        %690 = vmatpush2.msra.mxu0 0.0
        %691 = vmatprep.subr.mxu0 0.0
        %692 = vmatpush2.msra.mxu0 0.0
        %693 = vmatprep.subr.mxu0 0.0
        %694 = vmatpush2.msra.mxu0 0.0
        %695 = vmatprep.subr.mxu0 0.0
        %696 = vmatpush2.msra.mxu0 0.0
        %697 = vmatprep.subr.mxu0 0.0
        %698 = vmatpush2.msra.mxu0 0.0
        %699 = vmatprep.subr.mxu0 0.0
        %700 = vmatpush2.msra.mxu0 0.0
        %701 = vmatprep.mubr.f32.mxu0 0.0
        %702 = vmatmul.mubr.f32.gmra.mxu0 %v635
        %v703 = vpop.f32.mrf.mxu0
        %v704 = vadd.f32 0.0, %v703
        %v705 = vpop.f32.mrf.mxu0
        %706 = vdwg.mxu0
        %v707 = vrcp.pop %v557
        %v708 = vrcp.pop %v560
        %v709 = vmul.f32 %v631, %v707
        %v710 = vmul.f32 %v704, %v708
        %711 = vst.msk [vmem:[%s360] sm:$0xff] %vm379, %v709
        %712 = vst.msk [vmem:[%s360 + $0x8] sm:$0xff] %vm379, %v710
        %s713 = sand.u32 %s173, 1
        %s714 = scalar_lea.sflag [#allocation4], %s713
        %s715 = sand.u32 %s173, 1
        %s716 = smul.addr %s715, 16
        %s717 = scalar_lea.vmem [#allocation8], %s716
        // Predicated region
        $region49: #{tpu_custom_call.1} parent=35 // pred_check
          %p718 = pneg %p183
        $region50: #{tpu_custom_call.1} parent=35 // pred_check_branch
          %720 = sbr.rel (%p718) target = $region52
        $region51: #{tpu_custom_call.1} parent=35 // pred_region
          %s721 = smul.u32 2, %s31
          %s723 = ssub.s32 256, 256
          %724 = vsyncadd %s714, %s723
          %s725 = smul.addr %s721, 2
          %s726 = sadd.s32 %s30, %s725
          %s727 = smul.addr %s29, 4
          %s728 = sadd.s32 %s726, %s727
          %s729 = smul.addr %s728, 128
          %s730 = scalar_lea.hbm %s4, %s729
          %s731 = sshll.u32 %s717, 4
          %s732 = int_to_ptr.vmem [resolvable:$true] %s731
          %737 = dma.vmem_to_hbm [thread:$0]  %s732, 256, %s730, %s714, 128, 256, 8
        $region52: #{tpu_custom_call.1} parent=35 // pred_fallthru
          _
      $region36: #{tpu_custom_call.1} parent=5 // pred_fallthru
        _
      %p738 = scmp.le.s32.totalorder 2, %s19
      // Predicated region
      $region53: #{tpu_custom_call.1} parent=5 // pred_check
        %p739 = pneg %p738
      $region54: #{tpu_custom_call.1} parent=5 // pred_check_branch
        %741 = sbr.rel (%p739) target = $region56
      $region55: #{tpu_custom_call.1} parent=5 // pred_region
        %s742 = ssub.s32 %s19, 2
        // Predicated region
        $region57: #{tpu_custom_call.1} parent=55 // pred_check
          %p743 = pneg %p189
        $region58: #{tpu_custom_call.1} parent=55 // pred_check_branch
          %745 = sbr.rel (%p743) target = $region60
        $region59: #{tpu_custom_call.1} parent=55 // pred_region
          %s746 = sand.u32 %s174, 1
          %s747 = scalar_lea.sflag [#allocation4], %s746
          %s748 = sand.u32 %s174, 1
          %s749 = smul.addr %s748, 16
          %s750 = scalar_lea.vmem [#allocation8], %s749
          %751 = dma.done %s747, 256
        $region60: #{tpu_custom_call.1} parent=55 // pred_fallthru
          _
      $region56: #{tpu_custom_call.1} parent=5 // pred_fallthru
        _
    $region6: #{tpu_custom_call.1} parent=1 // loop_footer
      %s23 = sadd.s32 1, %s19
    $region7: #{tpu_custom_call.1} parent=1 // loop_footer_branch
      %18 = sbr.rel target = $region3
    $region8: #{tpu_custom_call.1} parent=1 // loop_exit
      _
    %752 = vsyncpa [#allocation3], 1
    %s753 = scalar_lea.sflag [#allocation3], 1
    %754 = vsyncpa %s753, 1
    %755 = vsyncpa [#allocation6], 1
    %s756 = scalar_lea.sflag [#allocation6], 1
    %757 = vsyncpa %s756, 1
    %758 = vsyncpa [#allocation4], 1
    %s759 = scalar_lea.sflag [#allocation4], 1
    %760 = vsyncpa %s759, 1

</llo_original>
